<compile_context>
chip_gen: v7x
topology: tpu7x:2x2x1
jax: 0.10.0
libtpu: 0.0.40
codegen_flags: <defaults>
</compile_context>

<pallas_src>
import jax
import jax.numpy as jnp
from jax.experimental import pallas as pl
from jax.experimental.pallas import tpu as pltpu

BN_EPS = 1e-5


def _pred_mlp_kernel(x_ref, w1_ref, gb_ref, w2_ref, b2_ref, o_ref):
    k = pl.program_id(0)

    # layer1 linear for this hidden tile (bf16 MXU inputs, f32 accumulation).
    # No bias: a per-feature constant is exactly cancelled by train-mode BN.
    h = jnp.dot(x_ref[...], w1_ref[...], preferred_element_type=jnp.float32)

    # Fused BatchNorm1d (training mode, biased batch variance) + affine + ReLU.
    # Stats are per hidden feature over the full batch (whole batch is resident
    # in this block), so they are exact within a hidden tile.
    inv_n = 1.0 / h.shape[0]
    mean = jnp.sum(h, axis=0, keepdims=True) * inv_n
    mean_sq = jnp.sum(h * h, axis=0, keepdims=True) * inv_n
    var = mean_sq - mean * mean
    gb = gb_ref[...]                      # (2, tile): row 0 = gamma, row 1 = beta
    scale = gb[0:1, :] * jax.lax.rsqrt(var + BN_EPS)
    shift = gb[1:2, :] - mean * scale
    h = jnp.maximum(h * scale + shift, 0.0)

    # Output block index is constant across the reduction axis -> o_ref is the
    # resident f32 accumulator.  Initialize with the layer2 bias at k == 0.
    @pl.when(k == 0)
    def _():
        o_ref[...] = jnp.broadcast_to(b2_ref[...], o_ref.shape)

    # layer2 partial product for this hidden tile (bf16 MXU, f32 accumulate).
    o_ref[...] += jnp.dot(h.astype(jnp.bfloat16), w2_ref[...],
                          preferred_element_type=jnp.float32)


def prediction_mlp_forward(x, params, *, hidden_tile=None):
    """x: (N, in_dim) float32.  params: dict with bf16 pre-transposed weights."""
    n, in_dim = x.shape
    hidden_dim = params["w1"].shape[1]
    out_dim = params["w2"].shape[1]

    if hidden_tile is None:
        # Prefer 256 (native MXU contraction width on v6e/v7x), then 128,
        # otherwise a single full-hidden tile.
        if hidden_dim % 256 == 0:
            hidden_tile = 256
        elif hidden_dim % 128 == 0:
            hidden_tile = 128
        else:
            hidden_tile = hidden_dim
    assert hidden_dim % hidden_tile == 0
    n_k = hidden_dim // hidden_tile

    # Cast x once (outside the grid loop); weights are already bf16.
    x_bf16 = x.astype(jnp.bfloat16)
    gamma_beta = jnp.concatenate([params["gamma"], params["beta"]], axis=0)

    grid_spec = pltpu.PrefetchScalarGridSpec(
        num_scalar_prefetch=0,
        grid=(n_k,),
        in_specs=[
            # x stays resident (constant block index) across the reduction.
            pl.BlockSpec((n, in_dim), lambda k: (0, 0)),
            # w1 hidden-column tile / w2 hidden-row tile stream per step.
            pl.BlockSpec((in_dim, hidden_tile), lambda k: (0, k)),
            pl.BlockSpec((2, hidden_tile), lambda k: (0, k)),     # gamma/beta
            pl.BlockSpec((hidden_tile, out_dim), lambda k: (k, 0)),
            pl.BlockSpec((1, out_dim), lambda k: (0, 0)),         # b2
        ],
        # Constant block index -> output is the resident f32 accumulator.
        out_specs=pl.BlockSpec((n, out_dim), lambda k: (0, 0)),
    )

    # VMEM budget: (conservatively) double-buffered operands + headroom,
    # capped to physical capacity minus headroom for compiler scratch.
    vmem_bytes = (
        2 * (n * in_dim * 2)                                   # x (bf16)
        + 2 * (in_dim * hidden_tile * 2)                       # w1 tile (bf16)
        + 2 * (2 * hidden_tile * 4)                            # gamma/beta tile
        + 2 * (hidden_tile * out_dim * 2)                      # w2 tile (bf16)
        + 2 * (out_dim * 4)                                    # b2
        + 2 * (n * out_dim * 4)                                # output/accumulator
        + (4 << 20)                                            # headroom
    )
    capacity = 128 << 20
    try:
        capacity = int(pltpu.get_tpu_info().vmem_capacity_bytes)
    except Exception:
        pass
    cap = capacity - (16 << 20)        # leave room for internal scratch/sems
    vmem_bytes = int(min(max(vmem_bytes, 16 << 20), cap))

    return pl.pallas_call(
        _pred_mlp_kernel,
        out_shape=jax.ShapeDtypeStruct((n, out_dim), jnp.float32),
        grid_spec=grid_spec,
        compiler_params=pltpu.CompilerParams(
            dimension_semantics=("arbitrary",),   # hidden axis is a reduction
            vmem_limit_bytes=vmem_bytes,
        ),
    )(x_bf16, params["w1"], gamma_beta, params["w2"], params["b2"])


def init_params(key, in_dim, hidden_dim, out_dim):
    """Deterministic synthetic init (PyTorch-Linear-style uniform bounds).

    Weights stored pre-transposed (in_features, out_features) in bf16 to halve
    weight HBM traffic; BN affine params and layer2 bias stay f32.  layer1's
    bias is omitted entirely (exactly cancelled by train-mode BatchNorm).
    """
    k1, k2, k3 = jax.random.split(key, 3)
    bound1 = 1.0 / jnp.sqrt(in_dim)
    bound2 = 1.0 / jnp.sqrt(hidden_dim)
    return {
        "w1": jax.random.uniform(k1, (in_dim, hidden_dim), jnp.float32,
                                 -bound1, bound1).astype(jnp.bfloat16),
        "gamma": jnp.ones((1, hidden_dim), jnp.float32),
        "beta": jnp.zeros((1, hidden_dim), jnp.float32),
        "w2": jax.random.uniform(k2, (hidden_dim, out_dim), jnp.float32,
                                 -bound2, bound2).astype(jnp.bfloat16),
        "b2": jax.random.uniform(k3, (1, out_dim), jnp.float32,
                                 -bound2, bound2),
    }


def _reference(x, p):
    # Pure-JAX reference using the same bf16-quantized x / weights in f32.
    xq = x.astype(jnp.bfloat16).astype(jnp.float32)
    w1 = p["w1"].astype(jnp.float32)
    w2 = p["w2"].astype(jnp.float32)
    h = xq @ w1                              # layer1 bias cancels under BN
    mean = h.mean(axis=0, keepdims=True)
    var = ((h - mean) ** 2).mean(axis=0, keepdims=True)
    h = (h - mean) / jnp.sqrt(var + BN_EPS)
    h = h * p["gamma"] + p["beta"]
    h = jnp.maximum(h, 0.0)
    return h @ w2 + p["b2"]


if __name__ == "__main__":
    # Small, lane-dense bottleneck shapes consistent with the module
    # (module defaults are in=1024, hidden=512, out=1024).
    N, IN_DIM, HIDDEN_DIM, OUT_DIM = 16, 256, 512, 256

    key = jax.random.PRNGKey(0)
    kx, kp = jax.random.split(key)
    x = jax.random.normal(kx, (N, IN_DIM), jnp.float32)
    params = init_params(kp, IN_DIM, HIDDEN_DIM, OUT_DIM)

    out = prediction_mlp_forward(x, params)   # grid of 2 hidden tiles of 256
    out = jax.block_until_ready(out)

    ref = _reference(x, params)
    assert out.shape == (N, OUT_DIM)
    # bf16 MXU inputs with f32 accumulation: ~1e-2 relative vs f32 reference.
    assert jnp.allclose(out, ref, atol=5e-2, rtol=5e-2), (
        float(jnp.max(jnp.abs(out - ref))))

    print("KERNEL_OK")
</pallas_src>

<mosaic_0001>
module attributes {stable_mosaic.version = 11 : i64} {
  func.func @_pred_mlp_kernel(%arg0: i32, %arg1: memref<16x256xbf16, #tpu.memory_space<vmem>>, %arg2: memref<256x256xbf16, #tpu.memory_space<vmem>>, %arg3: memref<2x256xf32, #tpu.memory_space<vmem>>, %arg4: memref<256x256xbf16, #tpu.memory_space<vmem>>, %arg5: memref<1x256xf32, #tpu.memory_space<vmem>>, %arg6: memref<16x256xf32, #tpu.memory_space<vmem>>) attributes {dimension_semantics = [#tpu.dimension_semantics<arbitrary>], iteration_bounds = array<i64: 2>, scalar_prefetch = 0 : i64, scratch_operands = 0 : i64, tpu.core_type = #tpu.core_type<tc>, window_params = [{pipeline_mode = #tpu.pipeline_mode<synchronous>, transform_indices = @transform_0, window_bounds = array<i64: 16, 256>}, {transform_indices = @transform_1, window_bounds = array<i64: 256, 256>}, {transform_indices = @transform_2, window_bounds = array<i64: 2, 256>}, {transform_indices = @transform_3, window_bounds = array<i64: 256, 256>}, {pipeline_mode = #tpu.pipeline_mode<synchronous>, transform_indices = @transform_4, window_bounds = array<i64: 1, 256>}, {pipeline_mode = #tpu.pipeline_mode<synchronous>, transform_indices = @transform_5, window_bounds = array<i64: 16, 256>}]} {
    %c0 = arith.constant 0 : index
    %c0_0 = arith.constant 0 : index
    %0 = vector.load %arg1[%c0, %c0_0] : memref<16x256xbf16, #tpu.memory_space<vmem>>, vector<16x256xbf16>
    %c0_1 = arith.constant 0 : index
    %c0_2 = arith.constant 0 : index
    %1 = vector.load %arg2[%c0_1, %c0_2] : memref<256x256xbf16, #tpu.memory_space<vmem>>, vector<256x256xbf16>
    %cst = arith.constant dense<0.000000e+00> : vector<16x256xf32>
    %2 = tpu.matmul %0, %1, %cst {dimension_numbers = #tpu.dot_dimension_numbers<[1], [0], [0], [1], [0, 0, 1, 1], [], []>} : vector<16x256xbf16>, vector<256x256xbf16>, vector<16x256xf32> -> vector<16x256xf32>
    %cst_3 = arith.constant dense<0.000000e+00> : vector<256xf32>
    %3 = vector.multi_reduction <add>, %2, %cst_3 [0] : vector<16x256xf32> to vector<256xf32>
    %4 = vector.shape_cast %3 : vector<256xf32> to vector<1x256xf32>
    %cst_4 = arith.constant 6.250000e-02 : f32
    %5 = vector.broadcast %cst_4 : f32 to vector<1x256xf32>
    %6 = arith.mulf %4, %5 : vector<1x256xf32>
    %7 = arith.mulf %2, %2 : vector<16x256xf32>
    %cst_5 = arith.constant dense<0.000000e+00> : vector<256xf32>
    %8 = vector.multi_reduction <add>, %7, %cst_5 [0] : vector<16x256xf32> to vector<256xf32>
    %9 = vector.shape_cast %8 : vector<256xf32> to vector<1x256xf32>
    %cst_6 = arith.constant 6.250000e-02 : f32
    %10 = vector.broadcast %cst_6 : f32 to vector<1x256xf32>
    %11 = arith.mulf %9, %10 : vector<1x256xf32>
    %12 = arith.mulf %6, %6 : vector<1x256xf32>
    %13 = arith.subf %11, %12 : vector<1x256xf32>
    %c0_7 = arith.constant 0 : index
    %c0_8 = arith.constant 0 : index
    %14 = vector.load %arg3[%c0_7, %c0_8] : memref<2x256xf32, #tpu.memory_space<vmem>>, vector<2x256xf32>
    %15 = vector.extract_strided_slice %14 {offsets = [0, 0], sizes = [1, 256], strides = [1, 1]} : vector<2x256xf32> to vector<1x256xf32>
    %cst_9 = arith.constant 9.99999974E-6 : f32
    %16 = vector.broadcast %cst_9 : f32 to vector<1x256xf32>
    %17 = arith.addf %13, %16 : vector<1x256xf32>
    %18 = math.rsqrt %17 : vector<1x256xf32>
    %19 = arith.mulf %15, %18 : vector<1x256xf32>
    %20 = vector.extract_strided_slice %14 {offsets = [1, 0], sizes = [1, 256], strides = [1, 1]} : vector<2x256xf32> to vector<1x256xf32>
    %21 = arith.mulf %6, %19 : vector<1x256xf32>
    %22 = arith.subf %20, %21 : vector<1x256xf32>
    %23 = vector.broadcast %19 : vector<1x256xf32> to vector<16x256xf32>
    %24 = arith.mulf %2, %23 : vector<16x256xf32>
    %25 = vector.broadcast %22 : vector<1x256xf32> to vector<16x256xf32>
    %26 = arith.addf %24, %25 : vector<16x256xf32>
    %cst_10 = arith.constant 0.000000e+00 : f32
    %27 = vector.broadcast %cst_10 : f32 to vector<16x256xf32>
    %28 = arith.maximumf %26, %27 : vector<16x256xf32>
    %c0_i32 = arith.constant 0 : i32
    %29 = arith.cmpi eq, %arg0, %c0_i32 : i32
    %30 = arith.extui %29 : i1 to i32
    %c0_i32_11 = arith.constant 0 : i32
    %31 = arith.cmpi ne, %30, %c0_i32_11 : i32
    scf.if %31 {
      %c0_19 = arith.constant 0 : index
      %c0_20 = arith.constant 0 : index
      %38 = vector.load %arg5[%c0_19, %c0_20] : memref<1x256xf32, #tpu.memory_space<vmem>>, vector<1x256xf32>
      %39 = vector.shape_cast %38 : vector<1x256xf32> to vector<1x256xf32>
      %40 = vector.broadcast %39 : vector<1x256xf32> to vector<16x256xf32>
      %c0_21 = arith.constant 0 : index
      %c0_22 = arith.constant 0 : index
      %41 = vector.load %arg6[%c0_21, %c0_22] : memref<16x256xf32, #tpu.memory_space<vmem>>, vector<16x256xf32>
      tpu.vector_store %arg6[%c0_21, %c0_22], %40 {strides = array<i32>} : memref<16x256xf32, #tpu.memory_space<vmem>>, vector<16x256xf32>,
    } else {
    }
    %c0_12 = arith.constant 0 : index
    %c0_13 = arith.constant 0 : index
    %32 = vector.load %arg6[%c0_12, %c0_13] : memref<16x256xf32, #tpu.memory_space<vmem>>, vector<16x256xf32>
    %33 = arith.truncf %28 : vector<16x256xf32> to vector<16x256xbf16>
    %c0_14 = arith.constant 0 : index
    %c0_15 = arith.constant 0 : index
    %34 = vector.load %arg4[%c0_14, %c0_15] : memref<256x256xbf16, #tpu.memory_space<vmem>>, vector<256x256xbf16>
    %cst_16 = arith.constant dense<0.000000e+00> : vector<16x256xf32>
    %35 = tpu.matmul %33, %34, %cst_16 {dimension_numbers = #tpu.dot_dimension_numbers<[1], [0], [0], [1], [0, 0, 1, 1], [], []>} : vector<16x256xbf16>, vector<256x256xbf16>, vector<16x256xf32> -> vector<16x256xf32>
    %36 = arith.addf %32, %35 : vector<16x256xf32>
    %c0_17 = arith.constant 0 : index
    %c0_18 = arith.constant 0 : index
    %37 = vector.load %arg6[%c0_17, %c0_18] : memref<16x256xf32, #tpu.memory_space<vmem>>, vector<16x256xf32>
    tpu.vector_store %arg6[%c0_17, %c0_18], %36 {strides = array<i32>} : memref<16x256xf32, #tpu.memory_space<vmem>>, vector<16x256xf32>,
    return
  }
  func.func @transform_0(%arg0: i32) -> (i32, i32) {
    %c0_i32 = arith.constant 0 : i32
    %c0_i32_0 = arith.constant 0 : i32
    %c0_i32_1 = arith.constant 0 : i32
    return %c0_i32, %c0_i32_0 : i32, i32
  }
  func.func @transform_1(%arg0: i32) -> (i32, i32) {
    %c0_i32 = arith.constant 0 : i32
    %c0_i32_0 = arith.constant 0 : i32
    return %c0_i32, %arg0 : i32, i32
  }
  func.func @transform_2(%arg0: i32) -> (i32, i32) {
    %c0_i32 = arith.constant 0 : i32
    %c0_i32_0 = arith.constant 0 : i32
    return %c0_i32, %arg0 : i32, i32
  }
  func.func @transform_3(%arg0: i32) -> (i32, i32) {
    %c0_i32 = arith.constant 0 : i32
    %c0_i32_0 = arith.constant 0 : i32
    return %arg0, %c0_i32 : i32, i32
  }
  func.func @transform_4(%arg0: i32) -> (i32, i32) {
    %c0_i32 = arith.constant 0 : i32
    %c0_i32_0 = arith.constant 0 : i32
    %c0_i32_1 = arith.constant 0 : i32
    return %c0_i32, %c0_i32_0 : i32, i32
  }
  func.func @transform_5(%arg0: i32) -> (i32, i32) {
    %c0_i32 = arith.constant 0 : i32
    %c0_i32_0 = arith.constant 0 : i32
    %c0_i32_1 = arith.constant 0 : i32
    return %c0_i32, %c0_i32_0 : i32, i32
  }
}

</mosaic_0001>

<llo_original>
// kernel: tpu_custom_call.1
$region0: #{tpu_custom_call.1}
  #allocation0 [shape = 'u32[]', space=smem, size = 0x4, offset = 0x4, fixed_abs, tag = 'smem constant byte address 0x4 - core index']
  #allocation1 [shape = 'u32[144,128]{1,0:T(1,128)}', space=vmem, size = 0x12000, scoped, tag = 'internal scratch']
  %s0 = inlined_call_operand.hbm [shape: bf16[16,256], index: 0, kind: input, shape index: {}]
  %s1 = inlined_call_operand.hbm [shape: bf16[256,512], index: 1, kind: input, shape index: {}]
  %s2 = inlined_call_operand.hbm [shape: f32[2,512], index: 2, kind: input, shape index: {}]
  %s3 = inlined_call_operand.hbm [shape: bf16[512,256], index: 3, kind: input, shape index: {}]
  %s4 = inlined_call_operand.vmem [shape: f32[1,256], index: 4, kind: input, shape index: {}]
  %s5 = inlined_call_operand.hbm [shape: f32[16,256], index: 5, kind: output, shape index: {}]
  %s6 = sld [smem:[#allocation0]]
  $region73: #{tpu_custom_call.1} parent=0
    _
  %s8 = ssub.s32 1, %s6
  %s9 = scalar_select 0, %s8, %s6
  $region1: #{tpu_custom_call.1} parent=0
    #allocation2 [shape = 'u8[8192]{0}', space=vmem, size = 0x2000, scoped, tag = 'input window, operand 0, single buffered']
    #allocation3 [shape = 's32[2]{0}', space=sflag, size = 0x8, scoped, tag = 'scoped memory for tpu_custom_call.1']
    #allocation4 [shape = 's32[2]{0}', space=sflag, size = 0x8, scoped, tag = 'scoped memory for tpu_custom_call.1']
    #allocation5 [shape = 'u8[262144]{0}', space=vmem, size = 0x40000, scoped, tag = 'input window, operand 1']
    #allocation6 [shape = 's32[2]{0}', space=sflag, size = 0x8, scoped, tag = 'scoped memory for tpu_custom_call.1']
    #allocation7 [shape = 'u8[4096]{0}', space=vmem, size = 0x1000, scoped, tag = 'input window, operand 2']
    #allocation8 [shape = 'u8[262144]{0}', space=vmem, size = 0x40000, scoped, tag = 'input window, operand 3']
    #allocation9 [shape = 's32[2]{0}', space=sflag, size = 0x8, scoped, tag = 'scoped memory for tpu_custom_call.1']
    #allocation10 [shape = 'u8[16384]{0}', space=vmem, size = 0x4000, scoped, tag = 'output window, operand 0, single buffered']
    %10 = vsyncpa [#allocation3], 0
    %11 = vsyncpa [#allocation6], 0
    %s12 = scalar_lea.sflag [#allocation6], 1
    %13 = vsyncpa %s12, 0
    %14 = vsyncpa [#allocation9], 0
    %s15 = scalar_lea.sflag [#allocation9], 1
    %16 = vsyncpa %s15, 0
    %17 = vsyncpa [#allocation4], 0
    loop: start=0, step=1, limit=4
    $region2: #{tpu_custom_call.1} parent=1 // loop_pre_header
      _
    $region3: #{tpu_custom_call.1} parent=1 // loop_header
      %s19 = sphi 0, %s23
      %p20 = scmp.ge.s32.totalorder %s19, 4
      %s27 = sphi 0, %s27
      %s29 = sphi 0, %s27
      %s30 = sphi 0, %s29
      %s44 = sphi 0, %s30
      %s50 = sphi 0, %s52
      %s53 = sphi 0, %s50
      %s54 = sphi 0, %s53
      %s70 = sphi 0, %s54
      %s76 = sphi 0, %s78
      %s79 = sphi 0, %s76
      %s80 = sphi 0, %s79
      %s96 = sphi 0, %s80
      %s102 = sphi 0, %s104
      %s105 = sphi 0, %s102
      %s106 = sphi 0, %s105
      %s122 = sphi 0, %s106
      %s126 = sphi 0, %s126
      %s128 = sphi 0, %s126
      %s129 = sphi 0, %s128
      %s143 = sphi 0, %s129
      %s147 = sphi 0, %s147
      %s149 = sphi 0, %s147
      %s150 = sphi 0, %s149
      %s164 = sphi 0, %s150
    $region4: #{tpu_custom_call.1} parent=1 // loop_header_branch
      %22 = sbr.rel (%p20) target = $region8
    $region5: #{tpu_custom_call.1} parent=1 // loop_body
      %s24 = ssub.s32 %s19, 1
      %s25 = ssub.s32 %s19, 2
      %s26 = sadd.s32 %s19, 1
      %s28 = sadd.s32 %s27, 1
      %p31 = scmp.eq.s32.totalorder %s19, 1
      %p32 = scmp.ne.s32.totalorder %s27, %s29
      %p33 = scmp.eq.s32.totalorder %s19, 0
      %p34 = por %p32, %p33
      %p35 = scmp.ne.s32.totalorder %s27, %s29
      %p36 = scmp.eq.s32.totalorder %s24, 1
      %p37 = por %p35, %p36
      %p38 = scmp.ne.s32.totalorder %s29, %s30
      %p39 = scmp.eq.s32.totalorder %s24, 0
      %p40 = por %p38, %p39
      %p41 = scmp.ne.s32.totalorder %s29, %s30
      %p42 = scmp.eq.s32.totalorder %s25, 1
      %p43 = por %p41, %p42
      %p45 = scmp.ne.s32.totalorder %s30, %s44
      %p46 = scmp.eq.s32.totalorder %s25, 0
      %p47 = por %p45, %p46
      %s48 = ssub.s32 %s19, %s26
      %p49 = scmp.eq.s32.totalorder %s48, 0
      %s51 = sadd.s32 %s50, 1
      %s52 = scalar_select %p49, %s50, %s51
      %p55 = pneg %p49
      %p56 = scmp.eq.s32.totalorder %s19, 1
      %p57 = por %p55, %p56
      %p58 = scmp.ne.s32.totalorder %s50, %s53
      %p59 = scmp.eq.s32.totalorder %s19, 0
      %p60 = por %p58, %p59
      %p61 = scmp.ne.s32.totalorder %s50, %s53
      %p62 = scmp.eq.s32.totalorder %s24, 1
      %p63 = por %p61, %p62
      %p64 = scmp.ne.s32.totalorder %s53, %s54
      %p65 = scmp.eq.s32.totalorder %s24, 0
      %p66 = por %p64, %p65
      %p67 = scmp.ne.s32.totalorder %s53, %s54
      %p68 = scmp.eq.s32.totalorder %s25, 1
      %p69 = por %p67, %p68
      %p71 = scmp.ne.s32.totalorder %s54, %s70
      %p72 = scmp.eq.s32.totalorder %s25, 0
      %p73 = por %p71, %p72
      %s74 = ssub.s32 %s19, %s26
      %p75 = scmp.eq.s32.totalorder %s74, 0
      %s77 = sadd.s32 %s76, 1
      %s78 = scalar_select %p75, %s76, %s77
      %p81 = pneg %p75
      %p82 = scmp.eq.s32.totalorder %s19, 1
      %p83 = por %p81, %p82
      %p84 = scmp.ne.s32.totalorder %s76, %s79
      %p85 = scmp.eq.s32.totalorder %s19, 0
      %p86 = por %p84, %p85
      %p87 = scmp.ne.s32.totalorder %s76, %s79
      %p88 = scmp.eq.s32.totalorder %s24, 1
      %p89 = por %p87, %p88
      %p90 = scmp.ne.s32.totalorder %s79, %s80
      %p91 = scmp.eq.s32.totalorder %s24, 0
      %p92 = por %p90, %p91
      %p93 = scmp.ne.s32.totalorder %s79, %s80
      %p94 = scmp.eq.s32.totalorder %s25, 1
      %p95 = por %p93, %p94
      %p97 = scmp.ne.s32.totalorder %s80, %s96
      %p98 = scmp.eq.s32.totalorder %s25, 0
      %p99 = por %p97, %p98
      %s100 = ssub.s32 %s19, %s26
      %p101 = scmp.eq.s32.totalorder %s100, 0
      %s103 = sadd.s32 %s102, 1
      %s104 = scalar_select %p101, %s102, %s103
      %p107 = pneg %p101
      %p108 = scmp.eq.s32.totalorder %s19, 1
      %p109 = por %p107, %p108
      %p110 = scmp.ne.s32.totalorder %s102, %s105
      %p111 = scmp.eq.s32.totalorder %s19, 0
      %p112 = por %p110, %p111
      %p113 = scmp.ne.s32.totalorder %s102, %s105
      %p114 = scmp.eq.s32.totalorder %s24, 1
      %p115 = por %p113, %p114
      %p116 = scmp.ne.s32.totalorder %s105, %s106
      %p117 = scmp.eq.s32.totalorder %s24, 0
      %p118 = por %p116, %p117
      %p119 = scmp.ne.s32.totalorder %s105, %s106
      %p120 = scmp.eq.s32.totalorder %s25, 1
      %p121 = por %p119, %p120
      %p123 = scmp.ne.s32.totalorder %s106, %s122
      %p124 = scmp.eq.s32.totalorder %s25, 0
      %p125 = por %p123, %p124
      %s127 = sadd.s32 %s126, 1
      %p130 = scmp.eq.s32.totalorder %s19, 1
      %p131 = scmp.ne.s32.totalorder %s126, %s128
      %p132 = scmp.eq.s32.totalorder %s19, 0
      %p133 = por %p131, %p132
      %p134 = scmp.ne.s32.totalorder %s126, %s128
      %p135 = scmp.eq.s32.totalorder %s24, 1
      %p136 = por %p134, %p135
      %p137 = scmp.ne.s32.totalorder %s128, %s129
      %p138 = scmp.eq.s32.totalorder %s24, 0
      %p139 = por %p137, %p138
      %p140 = scmp.ne.s32.totalorder %s128, %s129
      %p141 = scmp.eq.s32.totalorder %s25, 1
      %p142 = por %p140, %p141
      %p144 = scmp.ne.s32.totalorder %s129, %s143
      %p145 = scmp.eq.s32.totalorder %s25, 0
      %p146 = por %p144, %p145
      %s148 = sadd.s32 %s147, 1
      %p151 = scmp.eq.s32.totalorder %s19, 1
      %p152 = scmp.ne.s32.totalorder %s147, %s149
      %p153 = scmp.eq.s32.totalorder %s19, 0
      %p154 = por %p152, %p153
      %p155 = scmp.ne.s32.totalorder %s147, %s149
      %p156 = scmp.eq.s32.totalorder %s24, 1
      %p157 = por %p155, %p156
      %p158 = scmp.ne.s32.totalorder %s149, %s150
      %p159 = scmp.eq.s32.totalorder %s24, 0
      %p160 = por %p158, %p159
      %p161 = scmp.ne.s32.totalorder %s149, %s150
      %p162 = scmp.eq.s32.totalorder %s25, 1
      %p163 = por %p161, %p162
      %p165 = scmp.ne.s32.totalorder %s150, %s164
      %p166 = scmp.eq.s32.totalorder %s25, 0
      %p167 = por %p165, %p166
      %p168 = scmp.le.s32.totalorder 1, %s19
      %p169 = scmp.lt.s32.totalorder %s19, 3
      %p170 = pnand %p168, %p169
      %p171 = pneg %p170
      // Predicated region
      $region9: #{tpu_custom_call.1} parent=5 // pred_check
        _
      $region10: #{tpu_custom_call.1} parent=5 // pred_check_branch
        %173 = sbr.rel (%p170) target = $region12
      $region11: #{tpu_custom_call.1} parent=5 // pred_region
        %s174 = ssub.s32 %s19, 1
        // Predicated region
        $region13: #{tpu_custom_call.1} parent=11 // pred_check
          %p175 = pneg %p40
        $region14: #{tpu_custom_call.1} parent=11 // pred_check_branch
          %177 = sbr.rel (%p175) target = $region16
        $region15: #{tpu_custom_call.1} parent=11 // pred_region
          %s179 = ssub.s32 256, 256
          %180 = vsyncadd [#allocation3], %s179
          %s181 = sshll.u32 [#allocation2], 4
          %s182 = int_to_ptr.vmem [resolvable:$true] %s181
          %187 = dma.hbm_to_vmem [thread:$0]  %s0, 256, %s182, [#allocation3], 128, 128, 8
        $region16: #{tpu_custom_call.1} parent=11 // pred_fallthru
          _
        // Predicated region
        $region17: #{tpu_custom_call.1} parent=11 // pred_check
          %p188 = pneg %p139
        $region18: #{tpu_custom_call.1} parent=11 // pred_check_branch
          %190 = sbr.rel (%p188) target = $region20
        $region19: #{tpu_custom_call.1} parent=11 // pred_region
          _
        $region20: #{tpu_custom_call.1} parent=11 // pred_fallthru
          _
      $region12: #{tpu_custom_call.1} parent=5 // pred_fallthru
        _
      %p191 = scmp.lt.s32.totalorder %s19, 2
      // Predicated region
      $region21: #{tpu_custom_call.1} parent=5 // pred_check
        %p192 = pneg %p191
      $region22: #{tpu_custom_call.1} parent=5 // pred_check_branch
        %194 = sbr.rel (%p192) target = $region24
      $region23: #{tpu_custom_call.1} parent=5 // pred_region
        // Predicated region
        $region25: #{tpu_custom_call.1} parent=23 // pred_check
          %p195 = pneg %p60
        $region26: #{tpu_custom_call.1} parent=23 // pred_check_branch
          %197 = sbr.rel (%p195) target = $region28
        $region27: #{tpu_custom_call.1} parent=23 // pred_region
          %s198 = sand.u32 %s19, 1
          %s199 = scalar_lea.sflag [#allocation6], %s198
          %s200 = sand.u32 %s50, 1
          %s201 = smul.addr %s200, 256
          %s202 = scalar_lea.vmem [#allocation5], %s201
          %s203 = smul.u32 2, %s19
          %s205 = ssub.s32 4096, 4096
          %206 = vsyncadd %s199, %s205
          %s207 = smul.addr %s203, 64
          %s208 = scalar_lea.hbm %s1, %s207
          %s209 = sshll.u32 %s202, 4
          %s210 = int_to_ptr.vmem [resolvable:$true] %s209
          %215 = dma.hbm_to_vmem [thread:$0]  %s208, 4096, %s210, %s199, 256, 128, 8
        $region28: #{tpu_custom_call.1} parent=23 // pred_fallthru
          _
        // Predicated region
        $region29: #{tpu_custom_call.1} parent=23 // pred_check
          %p216 = pneg %p86
        $region30: #{tpu_custom_call.1} parent=23 // pred_check_branch
          %218 = sbr.rel (%p216) target = $region32
        $region31: #{tpu_custom_call.1} parent=23 // pred_region
          %s219 = sand.u32 %s19, 1
          %s220 = scalar_lea.sflag [#allocation6], %s219
          %s221 = sand.u32 %s76, 1
          %s222 = smul.addr %s221, 4
          %s223 = scalar_lea.vmem [#allocation7], %s222
          %s224 = smul.u32 2, %s19
          %s226 = ssub.s32 64, 64
          %227 = vsyncadd %s220, %s226
          %s228 = smul.addr %s224, 32
          %s229 = scalar_lea.hbm %s2, %s228
          %s231 = sshll.u32 %s223, 4
          %s232 = int_to_ptr.vmem [resolvable:$true] %s231
          %234 = dma.hbm_to_vmem [thread:$0]  %s229, 64, %s232, %s220
        $region32: #{tpu_custom_call.1} parent=23 // pred_fallthru
          _
        // Predicated region
        $region33: #{tpu_custom_call.1} parent=23 // pred_check
          %p235 = pneg %p112
        $region34: #{tpu_custom_call.1} parent=23 // pred_check_branch
          %237 = sbr.rel (%p235) target = $region36
        $region35: #{tpu_custom_call.1} parent=23 // pred_region
          %s238 = sand.u32 %s102, 1
          %s239 = scalar_lea.sflag [#allocation9], %s238
          %s240 = sand.u32 %s102, 1
          %s241 = smul.addr %s240, 256
          %s242 = scalar_lea.vmem [#allocation8], %s241
          %s243 = smul.u32 32, %s19
          %s245 = ssub.s32 4096, 4096
          %246 = vsyncadd %s239, %s245
          %s247 = smul.addr %s243, 2
          %s248 = smul.addr %s247, 64
          %s249 = scalar_lea.hbm %s3, %s248
          %s250 = sshll.u32 %s242, 4
          %s251 = int_to_ptr.vmem [resolvable:$true] %s250
          %256 = dma.hbm_to_vmem [thread:$0]  %s249, 4096, %s251, %s239, 128, 128, 8
        $region36: #{tpu_custom_call.1} parent=23 // pred_fallthru
          _
      $region24: #{tpu_custom_call.1} parent=5 // pred_fallthru
        _
      %p257 = scmp.le.s32.totalorder 1, %s19
      %p258 = scmp.lt.s32.totalorder %s19, 3
      %p259 = pnand %p257, %p258
      %p260 = pneg %p259
      // Predicated region
      $region37: #{tpu_custom_call.1} parent=5 // pred_check
        _
      $region38: #{tpu_custom_call.1} parent=5 // pred_check_branch
        %262 = sbr.rel (%p259) target = $region40
      $region39: #{tpu_custom_call.1} parent=5 // pred_region
        %s263 = ssub.s32 %s19, 1
        // Predicated region
        $region41: #{tpu_custom_call.1} parent=39 // pred_check
          %p264 = pneg %p40
        $region42: #{tpu_custom_call.1} parent=39 // pred_check_branch
          %266 = sbr.rel (%p264) target = $region44
        $region43: #{tpu_custom_call.1} parent=39 // pred_region
          %267 = dma.done [#allocation3], 256
        $region44: #{tpu_custom_call.1} parent=39 // pred_fallthru
          _
        %s268 = sand.u32 %s24, 1
        %s269 = scalar_lea.sflag [#allocation6], %s268
        %s270 = sand.u32 %s53, 1
        %s271 = smul.addr %s270, 256
        %s272 = scalar_lea.vmem [#allocation5], %s271
        // Predicated region
        $region45: #{tpu_custom_call.1} parent=39 // pred_check
          %p273 = pneg %p66
        $region46: #{tpu_custom_call.1} parent=39 // pred_check_branch
          %275 = sbr.rel (%p273) target = $region48
        $region47: #{tpu_custom_call.1} parent=39 // pred_region
          %276 = dma.done %s269, 4096
        $region48: #{tpu_custom_call.1} parent=39 // pred_fallthru
          _
        %s277 = sand.u32 %s24, 1
        %s278 = scalar_lea.sflag [#allocation6], %s277
        %s279 = sand.u32 %s79, 1
        %s280 = smul.addr %s279, 4
        %s281 = scalar_lea.vmem [#allocation7], %s280
        // Predicated region
        $region49: #{tpu_custom_call.1} parent=39 // pred_check
          %p282 = pneg %p92
        $region50: #{tpu_custom_call.1} parent=39 // pred_check_branch
          %284 = sbr.rel (%p282) target = $region52
        $region51: #{tpu_custom_call.1} parent=39 // pred_region
          %285 = dma.done %s278, 64
        $region52: #{tpu_custom_call.1} parent=39 // pred_fallthru
          _
        %s286 = sand.u32 %s105, 1
        %s287 = scalar_lea.sflag [#allocation9], %s286
        %s288 = sand.u32 %s105, 1
        %s289 = smul.addr %s288, 256
        %s290 = scalar_lea.vmem [#allocation8], %s289
        // Predicated region
        $region53: #{tpu_custom_call.1} parent=39 // pred_check
          %p291 = pneg %p118
        $region54: #{tpu_custom_call.1} parent=39 // pred_check_branch
          %293 = sbr.rel (%p291) target = $region56
        $region55: #{tpu_custom_call.1} parent=39 // pred_region
          %294 = dma.done %s287, 4096
        $region56: #{tpu_custom_call.1} parent=39 // pred_fallthru
          _
        %p295 = pneg %p40
        %p296 = pneg %p37
        %s297 = sand.u32 %s24, 1
        %s298 = scalar_lea.sflag [#allocation6], %s297
        %s299 = sand.u32 %s53, 1
        %s300 = smul.addr %s299, 256
        %s301 = scalar_lea.vmem [#allocation5], %s300
        %p302 = pneg %p66
        %p303 = pneg %p63
        %s304 = sand.u32 %s24, 1
        %s305 = scalar_lea.sflag [#allocation6], %s304
        %s306 = sand.u32 %s79, 1
        %s307 = smul.addr %s306, 4
        %s308 = scalar_lea.vmem [#allocation7], %s307
        %p309 = pneg %p92
        %p310 = pneg %p89
        %s311 = sand.u32 %s105, 1
        %s312 = scalar_lea.sflag [#allocation9], %s311
        %s313 = sand.u32 %s105, 1
        %s314 = smul.addr %s313, 256
        %s315 = scalar_lea.vmem [#allocation8], %s314
        %p316 = pneg %p118
        %p317 = pneg %p115
        %p318 = pneg %p139
        %p319 = pneg %p136
        %p320 = pneg %p160
        %p321 = pneg %p157
        %s322 = smul.u32 2, %s24
        %s323 = smul.u32 2, %s24
        %s324 = smul.u32 32, %s24
        %v325 = vld [vmem:[#allocation2] sm:$0xff]
        %v326 = vld [vmem:[#allocation2 + $0x8] sm:$0xff]
        %v327 = vld [vmem:[%s272] sm:$0xff]
        %v328 = vld [vmem:[%s272 + $0x8] sm:$0xff]
        %v329 = vld [vmem:[%s272 + $0x10] sm:$0xff]
        %v330 = vld [vmem:[%s272 + $0x18] sm:$0xff]
        %v331 = vld [vmem:[%s272 + $0x20] sm:$0xff]
        %v332 = vld [vmem:[%s272 + $0x28] sm:$0xff]
        %v333 = vld [vmem:[%s272 + $0x30] sm:$0xff]
        %v334 = vld [vmem:[%s272 + $0x38] sm:$0xff]
        %v335 = vld [vmem:[%s272 + $0x40] sm:$0xff]
        %v336 = vld [vmem:[%s272 + $0x48] sm:$0xff]
        %v337 = vld [vmem:[%s272 + $0x50] sm:$0xff]
        %v338 = vld [vmem:[%s272 + $0x58] sm:$0xff]
        %v339 = vld [vmem:[%s272 + $0x60] sm:$0xff]
        %v340 = vld [vmem:[%s272 + $0x68] sm:$0xff]
        %v341 = vld [vmem:[%s272 + $0x70] sm:$0xff]
        %v342 = vld [vmem:[%s272 + $0x78] sm:$0xff]
        %v343 = vld [vmem:[%s272 + $0x80] sm:$0xff]
        %v344 = vld [vmem:[%s272 + $0x88] sm:$0xff]
        %v345 = vld [vmem:[%s272 + $0x90] sm:$0xff]
        %v346 = vld [vmem:[%s272 + $0x98] sm:$0xff]
        %v347 = vld [vmem:[%s272 + $0xa0] sm:$0xff]
        %v348 = vld [vmem:[%s272 + $0xa8] sm:$0xff]
        %v349 = vld [vmem:[%s272 + $0xb0] sm:$0xff]
        %v350 = vld [vmem:[%s272 + $0xb8] sm:$0xff]
        %v351 = vld [vmem:[%s272 + $0xc0] sm:$0xff]
        %v352 = vld [vmem:[%s272 + $0xc8] sm:$0xff]
        %v353 = vld [vmem:[%s272 + $0xd0] sm:$0xff]
        %v354 = vld [vmem:[%s272 + $0xd8] sm:$0xff]
        %v355 = vld [vmem:[%s272 + $0xe0] sm:$0xff]
        %v356 = vld [vmem:[%s272 + $0xe8] sm:$0xff]
        %v357 = vld [vmem:[%s272 + $0xf0] sm:$0xff]
        %v358 = vld [vmem:[%s272 + $0xf8] sm:$0xff]
        %v361 = vunpack.c.l.b16 %v325
        %v362 = vunpack.c.h.b16 %v325
        %v363 = vunpack.c.l.b16 %v326
        %v364 = vunpack.c.h.b16 %v326
        %v365 = vpack.c.b16 %v363, %v361
        %v366 = vpack.c.b16 %v364, %v362
        %v401 = vunpack.c.l.b16 %v327
        %v402 = vunpack.c.h.b16 %v327
        %v403 = vunpack.c.l.b16 %v328
        %v404 = vunpack.c.h.b16 %v328
        %v405 = vunpack.c.l.b16 %v329
        %v406 = vunpack.c.h.b16 %v329
        %v407 = vunpack.c.l.b16 %v330
        %v408 = vunpack.c.h.b16 %v330
        %v409 = vunpack.c.l.b16 %v331
        %v410 = vunpack.c.h.b16 %v331
        %v411 = vunpack.c.l.b16 %v332
        %v412 = vunpack.c.h.b16 %v332
        %v413 = vunpack.c.l.b16 %v333
        %v414 = vunpack.c.h.b16 %v333
        %v415 = vunpack.c.l.b16 %v334
        %v416 = vunpack.c.h.b16 %v334
        %v417 = vunpack.c.l.b16 %v335
        %v418 = vunpack.c.h.b16 %v335
        %v419 = vunpack.c.l.b16 %v336
        %v420 = vunpack.c.h.b16 %v336
        %v421 = vunpack.c.l.b16 %v337
        %v422 = vunpack.c.h.b16 %v337
        %v423 = vunpack.c.l.b16 %v338
        %v424 = vunpack.c.h.b16 %v338
        %v425 = vunpack.c.l.b16 %v339
        %v426 = vunpack.c.h.b16 %v339
        %v427 = vunpack.c.l.b16 %v340
        %v428 = vunpack.c.h.b16 %v340
        %v429 = vunpack.c.l.b16 %v341
        %v430 = vunpack.c.h.b16 %v341
        %v431 = vunpack.c.l.b16 %v342
        %v432 = vunpack.c.h.b16 %v342
        %v433 = vunpack.c.l.b16 %v343
        %v434 = vunpack.c.h.b16 %v343
        %v435 = vunpack.c.l.b16 %v344
        %v436 = vunpack.c.h.b16 %v344
        %v437 = vunpack.c.l.b16 %v345
        %v438 = vunpack.c.h.b16 %v345
        %v439 = vunpack.c.l.b16 %v346
        %v440 = vunpack.c.h.b16 %v346
        %v441 = vunpack.c.l.b16 %v347
        %v442 = vunpack.c.h.b16 %v347
        %v443 = vunpack.c.l.b16 %v348
        %v444 = vunpack.c.h.b16 %v348
        %v445 = vunpack.c.l.b16 %v349
        %v446 = vunpack.c.h.b16 %v349
        %v447 = vunpack.c.l.b16 %v350
        %v448 = vunpack.c.h.b16 %v350
        %v449 = vunpack.c.l.b16 %v351
        %v450 = vunpack.c.h.b16 %v351
        %v451 = vunpack.c.l.b16 %v352
        %v452 = vunpack.c.h.b16 %v352
        %v453 = vunpack.c.l.b16 %v353
        %v454 = vunpack.c.h.b16 %v353
        %v455 = vunpack.c.l.b16 %v354
        %v456 = vunpack.c.h.b16 %v354
        %v457 = vunpack.c.l.b16 %v355
        %v458 = vunpack.c.h.b16 %v355
        %v459 = vunpack.c.l.b16 %v356
        %v460 = vunpack.c.h.b16 %v356
        %v461 = vunpack.c.l.b16 %v357
        %v462 = vunpack.c.h.b16 %v357
        %v463 = vunpack.c.l.b16 %v358
        %v464 = vunpack.c.h.b16 %v358
        %v465 = vpack.c.b16 %v403, %v401
        %v466 = vpack.c.b16 %v404, %v402
        %v467 = vpack.c.b16 %v407, %v405
        %v468 = vpack.c.b16 %v408, %v406
        %v469 = vpack.c.b16 %v411, %v409
        %v470 = vpack.c.b16 %v412, %v410
        %v471 = vpack.c.b16 %v415, %v413
        %v472 = vpack.c.b16 %v416, %v414
        %v473 = vpack.c.b16 %v419, %v417
        %v474 = vpack.c.b16 %v420, %v418
        %v475 = vpack.c.b16 %v423, %v421
        %v476 = vpack.c.b16 %v424, %v422
        %v477 = vpack.c.b16 %v427, %v425
        %v478 = vpack.c.b16 %v428, %v426
        %v479 = vpack.c.b16 %v431, %v429
        %v480 = vpack.c.b16 %v432, %v430
        %v481 = vpack.c.b16 %v435, %v433
        %v482 = vpack.c.b16 %v436, %v434
        %v483 = vpack.c.b16 %v439, %v437
        %v484 = vpack.c.b16 %v440, %v438
        %v485 = vpack.c.b16 %v443, %v441
        %v486 = vpack.c.b16 %v444, %v442
        %v487 = vpack.c.b16 %v447, %v445
        %v488 = vpack.c.b16 %v448, %v446
        %v489 = vpack.c.b16 %v451, %v449
        %v490 = vpack.c.b16 %v452, %v450
        %v491 = vpack.c.b16 %v455, %v453
        %v492 = vpack.c.b16 %v456, %v454
        %v493 = vpack.c.b16 %v459, %v457
        %v494 = vpack.c.b16 %v460, %v458
        %v495 = vpack.c.b16 %v463, %v461
        %v496 = vpack.c.b16 %v464, %v462
        %529 = vmatprep.subr.bf16.mxu0 %v466
        %530 = vmatpush1.bf16.msra.mxu0 %v465
        %531 = vmatprep.subr.bf16.mxu0 %v468
        %532 = vmatpush1.bf16.msra.mxu0 %v467
        %533 = vmatprep.subr.bf16.mxu0 %v470
        %534 = vmatpush1.bf16.msra.mxu0 %v469
        %535 = vmatprep.subr.bf16.mxu0 %v472
        %536 = vmatpush1.bf16.msra.mxu0 %v471
        %537 = vmatprep.subr.bf16.mxu0 %v474
        %538 = vmatpush1.bf16.msra.mxu0 %v473
        %539 = vmatprep.subr.bf16.mxu0 %v476
        %540 = vmatpush1.bf16.msra.mxu0 %v475
        %541 = vmatprep.subr.bf16.mxu0 %v478
        %542 = vmatpush1.bf16.msra.mxu0 %v477
        %543 = vmatprep.subr.bf16.mxu0 %v480
        %544 = vmatpush1.bf16.msra.mxu0 %v479
        %545 = vmatprep.subr.bf16.mxu0 %v482
        %546 = vmatpush1.bf16.msra.mxu0 %v481
        %547 = vmatprep.subr.bf16.mxu0 %v484
        %548 = vmatpush1.bf16.msra.mxu0 %v483
        %549 = vmatprep.subr.bf16.mxu0 %v486
        %550 = vmatpush1.bf16.msra.mxu0 %v485
        %551 = vmatprep.subr.bf16.mxu0 %v488
        %552 = vmatpush1.bf16.msra.mxu0 %v487
        %553 = vmatprep.subr.bf16.mxu0 %v490
        %554 = vmatpush1.bf16.msra.mxu0 %v489
        %555 = vmatprep.subr.bf16.mxu0 %v492
        %556 = vmatpush1.bf16.msra.mxu0 %v491
        %557 = vmatprep.subr.bf16.mxu0 %v494
        %558 = vmatpush1.bf16.msra.mxu0 %v493
        %559 = vmatprep.subr.bf16.mxu0 %v496
        %560 = vmatpush1.bf16.msra.mxu0 %v495
        %561 = vmatprep.mubr.bf16.mxu0 %v366
        %562 = vmatmul.mubr.bf16.gmra.mrb[0].mxu0 %v365
        %v563 = vpop.f32.mrb[0].mxu0
        %v564 = vadd.f32 0.0, %v563
        %v565 = vpop.f32.mrb[0].mxu0
        %v566 = vadd.f32 0.0, %v565
        %v567 = vpop.f32.mrb[0].mxu0
        %v568 = vadd.f32 0.0, %v567
        %v569 = vpop.f32.mrb[0].mxu0
        %v570 = vadd.f32 0.0, %v569
        %571 = vdwg.mxu0
        %v572 = vadd.f32 %v564, %v568
        %v573 = vrot.slane %v572, 4
        %v574 = vadd.f32 %v572, %v573
        %v575 = vrot.slane %v574, 2
        %v576 = vadd.f32 %v574, %v575
        %v577 = vrot.slane %v576, 1
        %v578 = vadd.f32 %v576, %v577
        %v579 = vadd.f32 %v566, %v570
        %v580 = vrot.slane %v579, 4
        %v581 = vadd.f32 %v579, %v580
        %v582 = vrot.slane %v581, 2
        %v583 = vadd.f32 %v581, %v582
        %v584 = vrot.slane %v583, 1
        %v585 = vadd.f32 %v583, %v584
        %v586 = vmul.f32 %v578, 0.0625
        %v587 = vmul.f32 %v585, 0.0625
        %v588 = vmul.f32 %v564, %v564
        %v589 = vmul.f32 %v566, %v566
        %v590 = vmul.f32 %v568, %v568
        %v591 = vmul.f32 %v570, %v570
        %v592 = vadd.f32 %v588, %v590
        %v593 = vrot.slane %v592, 4
        %v594 = vadd.f32 %v592, %v593
        %v595 = vrot.slane %v594, 2
        %v596 = vadd.f32 %v594, %v595
        %v597 = vrot.slane %v596, 1
        %v598 = vadd.f32 %v596, %v597
        %v599 = vadd.f32 %v589, %v591
        %v600 = vrot.slane %v599, 4
        %v601 = vadd.f32 %v599, %v600
        %v602 = vrot.slane %v601, 2
        %v603 = vadd.f32 %v601, %v602
        %v604 = vrot.slane %v603, 1
        %v605 = vadd.f32 %v603, %v604
        %v606 = vmul.f32 %v598, 0.0625
        %v607 = vmul.f32 %v605, 0.0625
        %v608 = vmul.f32 %v586, %v586
        %v609 = vmul.f32 %v587, %v587
        %v610 = vsub.f32 %v606, %v608
        %v611 = vsub.f32 %v607, %v609
        %v612 = vld [vmem:[%s281] sm:$0xf]
        %v613 = vadd.f32 %v610, 1e-05
        %v614 = vadd.f32 %v611, 1e-05
        %v615 = vrsqrt.pop %v613
        %v616 = vrsqrt.pop %v614
        %v619 = vcombine.low %v615, %v616
        %v621 = vunpack.c.l.s4 1983009808
        %v622 = vunpack.c.0.s8 %v621
        %v623 = vlaneseq
        %v624 = vshrl.u32 %v623, 7
        %v625 = vsub.s32 %v622, %v624
        %v626 = vrot.slane %v619, %v625
        %v628 = vmul.f32 %v612, %v626
        %v630 = vlaneseq
        %v631 = vshrl.u32 %v630, 7
        %v632 = vsub.s32 0, %v631
        %v633 = vrot.slane %v628, %v632
        %v634 = vlaneseq
        %v635 = vshrl.u32 %v634, 7
        %v636 = vsub.s32 2, %v635
        %v637 = vrot.slane %v628, %v636
        %v640 = vmul.f32 %v586, %v633
        %v641 = vmul.f32 %v587, %v637
        %v644 = vcombine.low %v640, %v641
        %v646 = vunpack.c.l.s4 1983009808
        %v647 = vunpack.c.0.s8 %v646
        %v648 = vlaneseq
        %v649 = vshrl.u32 %v648, 7
        %v650 = vsub.s32 %v647, %v649
        %v651 = vrot.slane %v644, %v650
        %v652 = vrot.slane %v651, 7
        %v654 = vsub.f32 %v612, %v652
        %v655 = vlaneseq
        %v656 = vshrl.u32 %v655, 7
        %v657 = vsub.s32 0, %v656
        %v658 = vrot.slane %v633, %v657
        %v659 = vlaneseq
        %v660 = vshrl.u32 %v659, 7
        %v661 = vsub.s32 0, %v660
        %v662 = vrot.slane %v637, %v661
        %v663 = vmul.f32 %v564, %v658
        %v664 = vmul.f32 %v566, %v662
        %v665 = vmul.f32 %v568, %v658
        %v666 = vmul.f32 %v570, %v662
        %v668 = vlaneseq
        %v669 = vshrl.u32 %v668, 7
        %v670 = vsub.s32 1, %v669
        %v671 = vrot.slane %v654, %v670
        %v672 = vlaneseq
        %v673 = vshrl.u32 %v672, 7
        %v674 = vsub.s32 3, %v673
        %v675 = vrot.slane %v654, %v674
        %v678 = vlaneseq
        %v679 = vshrl.u32 %v678, 7
        %v680 = vsub.s32 1, %v679
        %v681 = vrot.slane %v671, %v680
        %v682 = vlaneseq
        %v683 = vshrl.u32 %v682, 7
        %v684 = vsub.s32 1, %v683
        %v685 = vrot.slane %v675, %v684
        %v686 = vadd.f32 %v663, %v681
        %v687 = vadd.f32 %v664, %v685
        %v688 = vadd.f32 %v665, %v681
        %v689 = vadd.f32 %v666, %v685
        %v690 = vmax.f32 %v686, 0.0
        %v691 = vmax.f32 %v687, 0.0
        %v692 = vmax.f32 %v688, 0.0
        %v693 = vmax.f32 %v689, 0.0
        %p694 = scmp.eq.s32.totalorder %s24, 0
        // Predicated region
        $region57: #{tpu_custom_call.1} parent=39 // pred_check
          %p695 = pneg %p694
        $region58: #{tpu_custom_call.1} parent=39 // pred_check_branch
          %697 = sbr.rel (%p695) target = $region60
        $region59: #{tpu_custom_call.1} parent=39 // pred_region
          %v698 = vld [vmem:[%s4] sm:$0x3]
          %v700 = vlaneseq
          %v701 = vshrl.u32 %v700, 7
          %v702 = vsub.s32 0, %v701
          %v703 = vrot.slane %v698, %v702
          %v704 = vlaneseq
          %v705 = vshrl.u32 %v704, 7
          %v706 = vsub.s32 1, %v705
          %v707 = vrot.slane %v698, %v706
          %710 = vst [vmem:[#allocation10] sm:$0xff] %v703
          %711 = vst [vmem:[#allocation10 + $0x8] sm:$0xff] %v707
          %712 = vst [vmem:[#allocation10 + $0x10] sm:$0xff] %v703
          %713 = vst [vmem:[#allocation10 + $0x18] sm:$0xff] %v707
        $region60: #{tpu_custom_call.1} parent=39 // pred_fallthru
          _
        %v714 = vld [vmem:[#allocation10] sm:$0xff]
        %v715 = vld [vmem:[#allocation10 + $0x8] sm:$0xff]
        %v716 = vld [vmem:[#allocation10 + $0x10] sm:$0xff]
        %v717 = vld [vmem:[#allocation10 + $0x18] sm:$0xff]
        %v718 = vpack.c.bf16 %v692, %v690
        %v719 = vpack.c.bf16 %v693, %v691
        %v720 = vld [vmem:[%s290] sm:$0xff]
        %v721 = vld [vmem:[%s290 + $0x8] sm:$0xff]
        %v722 = vld [vmem:[%s290 + $0x10] sm:$0xff]
        %v723 = vld [vmem:[%s290 + $0x18] sm:$0xff]
        %v724 = vld [vmem:[%s290 + $0x20] sm:$0xff]
        %v725 = vld [vmem:[%s290 + $0x28] sm:$0xff]
        %v726 = vld [vmem:[%s290 + $0x30] sm:$0xff]
        %v727 = vld [vmem:[%s290 + $0x38] sm:$0xff]
        %v728 = vld [vmem:[%s290 + $0x40] sm:$0xff]
        %v729 = vld [vmem:[%s290 + $0x48] sm:$0xff]
        %v730 = vld [vmem:[%s290 + $0x50] sm:$0xff]
        %v731 = vld [vmem:[%s290 + $0x58] sm:$0xff]
        %v732 = vld [vmem:[%s290 + $0x60] sm:$0xff]
        %v733 = vld [vmem:[%s290 + $0x68] sm:$0xff]
        %v734 = vld [vmem:[%s290 + $0x70] sm:$0xff]
        %v735 = vld [vmem:[%s290 + $0x78] sm:$0xff]
        %v736 = vld [vmem:[%s290 + $0x80] sm:$0xff]
        %v737 = vld [vmem:[%s290 + $0x88] sm:$0xff]
        %v738 = vld [vmem:[%s290 + $0x90] sm:$0xff]
        %v739 = vld [vmem:[%s290 + $0x98] sm:$0xff]
        %v740 = vld [vmem:[%s290 + $0xa0] sm:$0xff]
        %v741 = vld [vmem:[%s290 + $0xa8] sm:$0xff]
        %v742 = vld [vmem:[%s290 + $0xb0] sm:$0xff]
        %v743 = vld [vmem:[%s290 + $0xb8] sm:$0xff]
        %v744 = vld [vmem:[%s290 + $0xc0] sm:$0xff]
        %v745 = vld [vmem:[%s290 + $0xc8] sm:$0xff]
        %v746 = vld [vmem:[%s290 + $0xd0] sm:$0xff]
        %v747 = vld [vmem:[%s290 + $0xd8] sm:$0xff]
        %v748 = vld [vmem:[%s290 + $0xe0] sm:$0xff]
        %v749 = vld [vmem:[%s290 + $0xe8] sm:$0xff]
        %v750 = vld [vmem:[%s290 + $0xf0] sm:$0xff]
        %v751 = vld [vmem:[%s290 + $0xf8] sm:$0xff]
        %v784 = vunpack.c.l.b16 %v720
        %v785 = vunpack.c.h.b16 %v720
        %v786 = vunpack.c.l.b16 %v721
        %v787 = vunpack.c.h.b16 %v721
        %v788 = vunpack.c.l.b16 %v722
        %v789 = vunpack.c.h.b16 %v722
        %v790 = vunpack.c.l.b16 %v723
        %v791 = vunpack.c.h.b16 %v723
        %v792 = vunpack.c.l.b16 %v724
        %v793 = vunpack.c.h.b16 %v724
        %v794 = vunpack.c.l.b16 %v725
        %v795 = vunpack.c.h.b16 %v725
        %v796 = vunpack.c.l.b16 %v726
        %v797 = vunpack.c.h.b16 %v726
        %v798 = vunpack.c.l.b16 %v727
        %v799 = vunpack.c.h.b16 %v727
        %v800 = vunpack.c.l.b16 %v728
        %v801 = vunpack.c.h.b16 %v728
        %v802 = vunpack.c.l.b16 %v729
        %v803 = vunpack.c.h.b16 %v729
        %v804 = vunpack.c.l.b16 %v730
        %v805 = vunpack.c.h.b16 %v730
        %v806 = vunpack.c.l.b16 %v731
        %v807 = vunpack.c.h.b16 %v731
        %v808 = vunpack.c.l.b16 %v732
        %v809 = vunpack.c.h.b16 %v732
        %v810 = vunpack.c.l.b16 %v733
        %v811 = vunpack.c.h.b16 %v733
        %v812 = vunpack.c.l.b16 %v734
        %v813 = vunpack.c.h.b16 %v734
        %v814 = vunpack.c.l.b16 %v735
        %v815 = vunpack.c.h.b16 %v735
        %v816 = vunpack.c.l.b16 %v736
        %v817 = vunpack.c.h.b16 %v736
        %v818 = vunpack.c.l.b16 %v737
        %v819 = vunpack.c.h.b16 %v737
        %v820 = vunpack.c.l.b16 %v738
        %v821 = vunpack.c.h.b16 %v738
        %v822 = vunpack.c.l.b16 %v739
        %v823 = vunpack.c.h.b16 %v739
        %v824 = vunpack.c.l.b16 %v740
        %v825 = vunpack.c.h.b16 %v740
        %v826 = vunpack.c.l.b16 %v741
        %v827 = vunpack.c.h.b16 %v741
        %v828 = vunpack.c.l.b16 %v742
        %v829 = vunpack.c.h.b16 %v742
        %v830 = vunpack.c.l.b16 %v743
        %v831 = vunpack.c.h.b16 %v743
        %v832 = vunpack.c.l.b16 %v744
        %v833 = vunpack.c.h.b16 %v744
        %v834 = vunpack.c.l.b16 %v745
        %v835 = vunpack.c.h.b16 %v745
        %v836 = vunpack.c.l.b16 %v746
        %v837 = vunpack.c.h.b16 %v746
        %v838 = vunpack.c.l.b16 %v747
        %v839 = vunpack.c.h.b16 %v747
        %v840 = vunpack.c.l.b16 %v748
        %v841 = vunpack.c.h.b16 %v748
        %v842 = vunpack.c.l.b16 %v749
        %v843 = vunpack.c.h.b16 %v749
        %v844 = vunpack.c.l.b16 %v750
        %v845 = vunpack.c.h.b16 %v750
        %v846 = vunpack.c.l.b16 %v751
        %v847 = vunpack.c.h.b16 %v751
        %v848 = vpack.c.b16 %v786, %v784
        %v849 = vpack.c.b16 %v787, %v785
        %v850 = vpack.c.b16 %v790, %v788
        %v851 = vpack.c.b16 %v791, %v789
        %v852 = vpack.c.b16 %v794, %v792
        %v853 = vpack.c.b16 %v795, %v793
        %v854 = vpack.c.b16 %v798, %v796
        %v855 = vpack.c.b16 %v799, %v797
        %v856 = vpack.c.b16 %v802, %v800
        %v857 = vpack.c.b16 %v803, %v801
        %v858 = vpack.c.b16 %v806, %v804
        %v859 = vpack.c.b16 %v807, %v805
        %v860 = vpack.c.b16 %v810, %v808
        %v861 = vpack.c.b16 %v811, %v809
        %v862 = vpack.c.b16 %v814, %v812
        %v863 = vpack.c.b16 %v815, %v813
        %v864 = vpack.c.b16 %v818, %v816
        %v865 = vpack.c.b16 %v819, %v817
        %v866 = vpack.c.b16 %v822, %v820
        %v867 = vpack.c.b16 %v823, %v821
        %v868 = vpack.c.b16 %v826, %v824
        %v869 = vpack.c.b16 %v827, %v825
        %v870 = vpack.c.b16 %v830, %v828
        %v871 = vpack.c.b16 %v831, %v829
        %v872 = vpack.c.b16 %v834, %v832
        %v873 = vpack.c.b16 %v835, %v833
        %v874 = vpack.c.b16 %v838, %v836
        %v875 = vpack.c.b16 %v839, %v837
        %v876 = vpack.c.b16 %v842, %v840
        %v877 = vpack.c.b16 %v843, %v841
        %v878 = vpack.c.b16 %v846, %v844
        %v879 = vpack.c.b16 %v847, %v845
        %912 = vmatprep.subr.bf16.mxu0 %v849
        %913 = vmatpush1.bf16.msra.mxu0 %v848
        %914 = vmatprep.subr.bf16.mxu0 %v851
        %915 = vmatpush1.bf16.msra.mxu0 %v850
        %916 = vmatprep.subr.bf16.mxu0 %v853
        %917 = vmatpush1.bf16.msra.mxu0 %v852
        %918 = vmatprep.subr.bf16.mxu0 %v855
        %919 = vmatpush1.bf16.msra.mxu0 %v854
        %920 = vmatprep.subr.bf16.mxu0 %v857
        %921 = vmatpush1.bf16.msra.mxu0 %v856
        %922 = vmatprep.subr.bf16.mxu0 %v859
        %923 = vmatpush1.bf16.msra.mxu0 %v858
        %924 = vmatprep.subr.bf16.mxu0 %v861
        %925 = vmatpush1.bf16.msra.mxu0 %v860
        %926 = vmatprep.subr.bf16.mxu0 %v863
        %927 = vmatpush1.bf16.msra.mxu0 %v862
        %928 = vmatprep.subr.bf16.mxu0 %v865
        %929 = vmatpush1.bf16.msra.mxu0 %v864
        %930 = vmatprep.subr.bf16.mxu0 %v867
        %931 = vmatpush1.bf16.msra.mxu0 %v866
        %932 = vmatprep.subr.bf16.mxu0 %v869
        %933 = vmatpush1.bf16.msra.mxu0 %v868
        %934 = vmatprep.subr.bf16.mxu0 %v871
        %935 = vmatpush1.bf16.msra.mxu0 %v870
        %936 = vmatprep.subr.bf16.mxu0 %v873
        %937 = vmatpush1.bf16.msra.mxu0 %v872
        %938 = vmatprep.subr.bf16.mxu0 %v875
        %939 = vmatpush1.bf16.msra.mxu0 %v874
        %940 = vmatprep.subr.bf16.mxu0 %v877
        %941 = vmatpush1.bf16.msra.mxu0 %v876
        %942 = vmatprep.subr.bf16.mxu0 %v879
        %943 = vmatpush1.bf16.msra.mxu0 %v878
        %944 = vmatprep.mubr.bf16.mxu0 %v719
        %945 = vmatmul.mubr.bf16.gmra.mrb[0].mxu0 %v718
        %v946 = vpop.f32.mrb[0].mxu0
        %v947 = vadd.f32 0.0, %v946
        %v948 = vpop.f32.mrb[0].mxu0
        %v949 = vadd.f32 0.0, %v948
        %v950 = vpop.f32.mrb[0].mxu0
        %v951 = vadd.f32 0.0, %v950
        %v952 = vpop.f32.mrb[0].mxu0
        %v953 = vadd.f32 0.0, %v952
        %954 = vdwg.mxu0
        %v955 = vadd.f32 %v714, %v947
        %v956 = vadd.f32 %v715, %v949
        %v957 = vadd.f32 %v716, %v951
        %v958 = vadd.f32 %v717, %v953
        %959 = vst [vmem:[#allocation10] sm:$0xff] %v955
        %960 = vst [vmem:[#allocation10 + $0x8] sm:$0xff] %v956
        %961 = vst [vmem:[#allocation10 + $0x10] sm:$0xff] %v957
        %962 = vst [vmem:[#allocation10 + $0x18] sm:$0xff] %v958
        // Predicated region
        $region61: #{tpu_custom_call.1} parent=39 // pred_check
          %p963 = pneg %p157
        $region62: #{tpu_custom_call.1} parent=39 // pred_check_branch
          %965 = sbr.rel (%p963) target = $region64
        $region63: #{tpu_custom_call.1} parent=39 // pred_region
          %s967 = ssub.s32 512, 512
          %968 = vsyncadd [#allocation4], %s967
          %s969 = sshll.u32 [#allocation10], 4
          %s970 = int_to_ptr.vmem [resolvable:$true] %s969
          %975 = dma.vmem_to_hbm [thread:$0]  %s970, 512, %s5, [#allocation4], 256, 256, 16
        $region64: #{tpu_custom_call.1} parent=39 // pred_fallthru
          _
        // Predicated region
        $region65: #{tpu_custom_call.1} parent=39 // pred_check
          %p976 = pneg %p157
        $region66: #{tpu_custom_call.1} parent=39 // pred_check_branch
          %978 = sbr.rel (%p976) target = $region68
        $region67: #{tpu_custom_call.1} parent=39 // pred_region
          %979 = dma.done [#allocation4], 512
        $region68: #{tpu_custom_call.1} parent=39 // pred_fallthru
          _
      $region40: #{tpu_custom_call.1} parent=5 // pred_fallthru
        _
      %p980 = scmp.le.s32.totalorder 2, %s19
      // Predicated region
      $region69: #{tpu_custom_call.1} parent=5 // pred_check
        %p981 = pneg %p980
      $region70: #{tpu_custom_call.1} parent=5 // pred_check_branch
        %983 = sbr.rel (%p981) target = $region72
      $region71: #{tpu_custom_call.1} parent=5 // pred_region
        %s984 = ssub.s32 %s19, 2
      $region72: #{tpu_custom_call.1} parent=5 // pred_fallthru
        _
    $region6: #{tpu_custom_call.1} parent=1 // loop_footer
      %s23 = sadd.s32 1, %s19
    $region7: #{tpu_custom_call.1} parent=1 // loop_footer_branch
      %18 = sbr.rel target = $region3
    $region8: #{tpu_custom_call.1} parent=1 // loop_exit
      _
    %985 = vsyncpa [#allocation3], 1
    %s986 = scalar_lea.sflag [#allocation3], 1
    %987 = vsyncpa %s986, 1
    %988 = vsyncpa [#allocation6], 1
    %s989 = scalar_lea.sflag [#allocation6], 1
    %990 = vsyncpa %s989, 1
    %991 = vsyncpa [#allocation9], 1
    %s992 = scalar_lea.sflag [#allocation9], 1
    %993 = vsyncpa %s992, 1
    %994 = vsyncpa [#allocation4], 1
    %s995 = scalar_lea.sflag [#allocation4], 1
    %996 = vsyncpa %s995, 1

</llo_original>
